<compile_context>
chip_gen: v5e
topology: v5e:2x2
jax: 0.10.0
libtpu: 0.0.40
codegen_flags: <defaults>
</compile_context>

<pallas_src>
import functools

import jax
import jax.numpy as jnp
from jax import lax
from jax.experimental import pallas as pl
from jax.experimental.pallas import tpu as pltpu


def fp_kernel(nbits, n_layers, *refs):
    # refs = (unknown_t, known, unknow_feats, known_feats, w0, b0, w1, b1, ..., out)
    unknown_t_ref, known_ref, unk_feats_ref, known_feats_ref = refs[:4]
    wb_refs = refs[4:4 + 2 * n_layers]
    out_ref = refs[4 + 2 * n_layers]

    u_t = unknown_t_ref[0]                         # (3, n)  xyz of unknown pts (transposed)
    k = known_ref[0]                               # (m, 3)  xyz of known pts
    m = k.shape[0]
    n = u_t.shape[1]

    # ---- pairwise squared distances on the MXU: |k|^2 + |u|^2 - 2 k.u ---------
    ku = jnp.dot(k, u_t, preferred_element_type=jnp.float32)       # (m, n)
    k2 = jnp.sum(k * k, axis=1, keepdims=True)                     # (m, 1)
    u2 = jnp.sum(u_t * u_t, axis=0, keepdims=True)                 # (1, n)
    d2 = jnp.maximum(k2 + u2 - 2.0 * ku, 0.0)                      # (m, n)

    # ---- three_nn via packed-key min -------------------------------------------
    # Non-negative f32 bit patterns are order-preserving as int32; clear the low
    # `nbits` mantissa bits and OR in the known-point row index.  One jnp.min per
    # neighbour yields both the (quantized) distance and a unique argmin; the
    # weight matrix is accumulated in the same loop.
    idx_mask = (1 << nbits) - 1
    row = lax.broadcasted_iota(jnp.int32, (m, n), 0)
    key = jnp.bitwise_or(
        jnp.bitwise_and(pltpu.bitcast(d2, jnp.int32), jnp.int32(~idx_mask)), row)

    remaining = key
    wm = jnp.zeros((m, n), jnp.float32)            # unnormalized interpolation weights
    norm = jnp.zeros((1, n), jnp.float32)
    for _ in range(3):
        mink = jnp.min(remaining, axis=0, keepdims=True)           # (1, n) packed key
        d2_sel = pltpu.bitcast(
            jnp.bitwise_and(mink, jnp.int32(~idx_mask)), jnp.float32)
        recip = 1.0 / (jnp.sqrt(d2_sel) + 1e-8)                    # (1, n) dist_recip
        norm = norm + recip
        onehot = remaining == mink                                 # exactly one row per column
        wm = wm + jnp.where(onehot, recip, 0.0)
        remaining = jnp.where(onehot, jnp.int32(2**31 - 1), remaining)

    inv_norm = pl.reciprocal(norm, approx=True)                    # (1, n)

    # ---- three_interpolate as a channel-major bf16 matmul on the MXU ------------
    kf = known_feats_ref[0].astype(jnp.bfloat16)                   # (C2, m)
    interp = jnp.dot(kf, wm.astype(jnp.bfloat16),
                     preferred_element_type=jnp.float32) * inv_norm   # (C2, n)

    # ---- concat([interp, skip]) + SharedMLP (conv+BN folded, ReLU), channel-major
    x = jnp.concatenate([interp, unk_feats_ref[0]], axis=0)        # (C1+C2, n)
    for li in range(n_layers):
        w = wb_refs[2 * li][...]                                   # (Cout, Cin)  bf16
        b = wb_refs[2 * li + 1][...]                               # (Cout, 1)    f32
        x = jnp.maximum(
            jnp.dot(w, x.astype(jnp.bfloat16),
                    preferred_element_type=jnp.float32) + b, 0.0)  # (Cout, n)

    out_ref[0] = x.astype(out_ref.dtype)


def _pick_tile_n(n, cap):
    if n <= cap:
        return n
    for t in range(cap - cap % 128, 0, -128):      # prefer lane-dense tiles
        if n % t == 0:
            return t
    for t in range(cap - cap % 8, 0, -8):
        if n % t == 0:
            return t
    return n


def pointnet_fp_forward(unknown, known, unknow_feats, known_feats, layers,
                        *, tile_n_cap=512):
    """layers: list of (W (Cout, Cin) with BN folded, b (Cout,)) per SharedMLP layer."""
    B, n, _ = unknown.shape
    m = known.shape[1]
    C1 = unknow_feats.shape[1]
    C2 = known_feats.shape[1]
    assert 3 <= m <= 8192, "packed-key three_nn assumes 3 <= m <= 8192"
    assert layers[0][0].shape[1] == C1 + C2
    nbits = max(1, (m - 1).bit_length())           # index bits stolen from f32 mantissa

    tile_n = _pick_tile_n(n, tile_n_cap)
    grid = (B, n // tile_n)

    # Only the tiny xyz tensor is transposed host-side; features and the output
    # stay in their native channel-major (B, C, n) layout.
    unknown_t = jnp.transpose(unknown, (0, 2, 1))                  # (B, 3, n)

    n_layers = len(layers)
    in_specs = [
        pl.BlockSpec((1, 3, tile_n), lambda b, i: (b, 0, i)),      # unknown (transposed)
        pl.BlockSpec((1, m, 3), lambda b, i: (b, 0, 0)),           # known
        pl.BlockSpec((1, C1, tile_n), lambda b, i: (b, 0, i)),     # skip feats
        pl.BlockSpec((1, C2, m), lambda b, i: (b, 0, 0)),          # known feats
    ]
    weight_args = []
    for (w, bias) in layers:
        cout, cin = w.shape
        weight_args.append(w.astype(jnp.bfloat16))                 # bf16 MXU weights
        weight_args.append(bias.reshape(cout, 1).astype(jnp.float32))
        in_specs.append(pl.BlockSpec((cout, cin), lambda b, i: (0, 0)))
        in_specs.append(pl.BlockSpec((cout, 1), lambda b, i: (0, 0)))
    h_out = layers[-1][0].shape[0]

    out = pl.pallas_call(
        functools.partial(fp_kernel, nbits, n_layers),
        out_shape=jax.ShapeDtypeStruct((B, h_out, n), jnp.float32),
        grid_spec=pltpu.PrefetchScalarGridSpec(
            num_scalar_prefetch=0,
            grid=grid,
            in_specs=in_specs,
            out_specs=pl.BlockSpec((1, h_out, tile_n), lambda b, i: (b, 0, i)),
        ),
        compiler_params=pltpu.CompilerParams(
            dimension_semantics=("parallel", "parallel"),
            vmem_limit_bytes=48 * 1024 * 1024,     # > 32 MiB default; < v7x 64 MiB physical
        ),
    )(unknown_t, known, unknow_feats, known_feats, *weight_args)
    return out                                                     # (B, mlp[-1], n)


def init_params(key, mlp, eps=1e-5):
    """Deterministic Conv2d(1x1, no bias) + BatchNorm2d params, folded for inference."""
    layers = []
    for i in range(len(mlp) - 1):
        cin, cout = mlp[i], mlp[i + 1]
        key, k1, k2, k3, k4 = jax.random.split(key, 5)
        w = 0.1 * jax.random.normal(k1, (cout, cin), jnp.float32)
        gamma = 1.0 + 0.1 * jax.random.normal(k2, (cout,), jnp.float32)
        beta = 0.1 * jax.random.normal(k3, (cout,), jnp.float32)
        running_mean = 0.1 * jax.random.normal(k4, (cout,), jnp.float32)
        running_var = jnp.ones((cout,), jnp.float32)
        scale = gamma / jnp.sqrt(running_var + eps)
        w_eff = w * scale[:, None]                                 # (Cout, Cin)
        b_eff = beta - running_mean * scale                        # (Cout,)
        layers.append((w_eff, b_eff))
    return layers


def reference(unknown, known, unknow_feats, known_feats, layers):
    """Pure-JAX f32 reference matching the PyTorch forward (eval-mode BN folded)."""
    d2 = jnp.sum((unknown[:, :, None, :] - known[:, None, :, :]) ** 2, axis=-1)  # (B, n, m)
    neg_top, idx = jax.lax.top_k(-d2, 3)
    dist = jnp.sqrt(jnp.maximum(-neg_top, 0.0))
    recip = 1.0 / (dist + 1e-8)
    norm = jnp.sum(recip, axis=2, keepdims=True)
    w = recip / norm

    def interp_one(kf, idx_b, w_b):        # kf (C2, m), idx_b (n, 3), w_b (n, 3)
        g = kf[:, idx_b]                   # (C2, n, 3)
        return jnp.sum(g * w_b[None], axis=-1)

    interp = jax.vmap(interp_one)(known_feats, idx, w)             # (B, C2, n)
    h = jnp.concatenate([interp, unknow_feats], axis=1)
    for (W, b) in layers:
        h = jnp.maximum(jnp.einsum('oc,bcn->bon', W, h) + b[None, :, None], 0.0)
    return h


if __name__ == "__main__":
    key = jax.random.PRNGKey(0)
    B, n, m, C1, C2 = 2, 16, 8, 4, 6
    mlp = [C1 + C2, 32, 16]

    k1, k2, k3, k4, k5 = jax.random.split(key, 5)
    unknown = jax.random.normal(k1, (B, n, 3), jnp.float32)
    known = jax.random.normal(k2, (B, m, 3), jnp.float32)
    unknow_feats = jax.random.normal(k3, (B, C1, n), jnp.float32)
    known_feats = jax.random.normal(k4, (B, C2, m), jnp.float32)

    layers = init_params(k5, mlp)

    out = pointnet_fp_forward(unknown, known, unknow_feats, known_feats, layers)
    out = jax.block_until_ready(out)

    ref = reference(unknown, known, unknow_feats, known_feats, layers)
    assert out.shape == (B, mlp[-1], n), out.shape
    # bf16 MXU matmuls + approx reciprocal -> compare with bf16-level tolerance.
    max_diff = float(jnp.max(jnp.abs(out - ref)))
    assert jnp.allclose(out, ref, atol=5e-2, rtol=5e-2), max_diff
    print("KERNEL_OK")
</pallas_src>

<mosaic_0001>
module attributes {stable_mosaic.version = 11 : i64} {
  func.func @fp_kernel(%arg0: i32, %arg1: i32, %arg2: memref<1x3x16xf32, #tpu.memory_space<vmem>>, %arg3: memref<1x8x3xf32, #tpu.memory_space<vmem>>, %arg4: memref<1x4x16xf32, #tpu.memory_space<vmem>>, %arg5: memref<1x6x8xf32, #tpu.memory_space<vmem>>, %arg6: memref<32x10xbf16, #tpu.memory_space<vmem>>, %arg7: memref<32x1xf32, #tpu.memory_space<vmem>>, %arg8: memref<16x32xbf16, #tpu.memory_space<vmem>>, %arg9: memref<16x1xf32, #tpu.memory_space<vmem>>, %arg10: memref<1x16x16xf32, #tpu.memory_space<vmem>>) attributes {dimension_semantics = [#tpu.dimension_semantics<parallel>, #tpu.dimension_semantics<parallel>], iteration_bounds = array<i64: 2, 1>, scalar_prefetch = 0 : i64, scratch_operands = 0 : i64, tpu.core_type = #tpu.core_type<tc>, window_params = [{transform_indices = @transform_0, window_bounds = array<i64: 1, 3, 16>}, {transform_indices = @transform_1, window_bounds = array<i64: 1, 8, 3>}, {transform_indices = @transform_2, window_bounds = array<i64: 1, 4, 16>}, {transform_indices = @transform_3, window_bounds = array<i64: 1, 6, 8>}, {pipeline_mode = #tpu.pipeline_mode<synchronous>, transform_indices = @transform_4, window_bounds = array<i64: 32, 10>}, {pipeline_mode = #tpu.pipeline_mode<synchronous>, transform_indices = @transform_5, window_bounds = array<i64: 32, 1>}, {pipeline_mode = #tpu.pipeline_mode<synchronous>, transform_indices = @transform_6, window_bounds = array<i64: 16, 32>}, {pipeline_mode = #tpu.pipeline_mode<synchronous>, transform_indices = @transform_7, window_bounds = array<i64: 16, 1>}, {transform_indices = @transform_8, window_bounds = array<i64: 1, 16, 16>}]} {
    %c0 = arith.constant 0 : index
    %c0_0 = arith.constant 0 : index
    %c0_1 = arith.constant 0 : index
    %0 = vector.load %arg2[%c0, %c0_0, %c0_1] : memref<1x3x16xf32, #tpu.memory_space<vmem>>, vector<1x3x16xf32>
    %1 = vector.shape_cast %0 : vector<1x3x16xf32> to vector<3x16xf32>
    %c0_2 = arith.constant 0 : index
    %c0_3 = arith.constant 0 : index
    %c0_4 = arith.constant 0 : index
    %2 = vector.load %arg3[%c0_2, %c0_3, %c0_4] : memref<1x8x3xf32, #tpu.memory_space<vmem>>, vector<1x8x3xf32>
    %3 = vector.shape_cast %2 : vector<1x8x3xf32> to vector<8x3xf32>
    %cst = arith.constant dense<0.000000e+00> : vector<8x16xf32>
    %4 = tpu.matmul %3, %1, %cst {dimension_numbers = #tpu.dot_dimension_numbers<[1], [0], [0], [1], [0, 0, 1, 1], [], []>} : vector<8x3xf32>, vector<3x16xf32>, vector<8x16xf32> -> vector<8x16xf32>
    %5 = arith.mulf %3, %3 : vector<8x3xf32>
    %cst_5 = arith.constant dense<0.000000e+00> : vector<8xf32>
    %6 = vector.multi_reduction <add>, %5, %cst_5 [1] : vector<8x3xf32> to vector<8xf32>
    %7 = vector.shape_cast %6 : vector<8xf32> to vector<8x1xf32>
    %8 = arith.mulf %1, %1 : vector<3x16xf32>
    %cst_6 = arith.constant dense<0.000000e+00> : vector<16xf32>
    %9 = vector.multi_reduction <add>, %8, %cst_6 [0] : vector<3x16xf32> to vector<16xf32>
    %10 = vector.shape_cast %9 : vector<16xf32> to vector<1x16xf32>
    %11 = vector.broadcast %7 : vector<8x1xf32> to vector<8x16xf32>
    %12 = vector.broadcast %10 : vector<1x16xf32> to vector<8x16xf32>
    %13 = arith.addf %11, %12 : vector<8x16xf32>
    %cst_7 = arith.constant 2.000000e+00 : f32
    %14 = vector.broadcast %cst_7 : f32 to vector<8x16xf32>
    %15 = arith.mulf %14, %4 : vector<8x16xf32>
    %16 = arith.subf %13, %15 : vector<8x16xf32>
    %cst_8 = arith.constant 0.000000e+00 : f32
    %17 = vector.broadcast %cst_8 : f32 to vector<8x16xf32>
    %18 = arith.maximumf %16, %17 : vector<8x16xf32>
    %19 = tpu.iota {dimensions = array<i32: 0>} : vector<8x16xi32>
    %20 = tpu.bitcast %18 : vector<8x16xf32> -> vector<8x16xi32>
    %c-8_i32 = arith.constant -8 : i32
    %21 = vector.broadcast %c-8_i32 : i32 to vector<8x16xi32>
    %22 = arith.andi %20, %21 : vector<8x16xi32>
    %23 = arith.ori %22, %19 : vector<8x16xi32>
    %cst_9 = arith.constant 0.000000e+00 : f32
    %24 = vector.broadcast %cst_9 : f32 to vector<8x16xf32>
    %cst_10 = arith.constant 0.000000e+00 : f32
    %25 = vector.broadcast %cst_10 : f32 to vector<1x16xf32>
    %cst_11 = arith.constant dense<2147483647> : vector<16xi32>
    %26 = vector.multi_reduction <minsi>, %23, %cst_11 [0] : vector<8x16xi32> to vector<16xi32>
    %27 = vector.shape_cast %26 : vector<16xi32> to vector<1x16xi32>
    %c-8_i32_12 = arith.constant -8 : i32
    %28 = vector.broadcast %c-8_i32_12 : i32 to vector<1x16xi32>
    %29 = arith.andi %27, %28 : vector<1x16xi32>
    %30 = tpu.bitcast %29 : vector<1x16xi32> -> vector<1x16xf32>
    %31 = math.sqrt %30 : vector<1x16xf32>
    %cst_13 = arith.constant 9.99999993E-9 : f32
    %32 = vector.broadcast %cst_13 : f32 to vector<1x16xf32>
    %33 = arith.addf %31, %32 : vector<1x16xf32>
    %cst_14 = arith.constant 1.000000e+00 : f32
    %34 = vector.broadcast %cst_14 : f32 to vector<1x16xf32>
    %35 = arith.divf %34, %33 : vector<1x16xf32>
    %36 = arith.addf %25, %35 : vector<1x16xf32>
    %37 = vector.broadcast %27 : vector<1x16xi32> to vector<8x16xi32>
    %38 = arith.cmpi eq, %23, %37 : vector<8x16xi32>
    %cst_15 = arith.constant 0.000000e+00 : f32
    %39 = vector.shape_cast %35 : vector<1x16xf32> to vector<1x16xf32>
    %40 = vector.broadcast %39 : vector<1x16xf32> to vector<8x16xf32>
    %41 = vector.broadcast %cst_15 : f32 to vector<8x16xf32>
    %42 = arith.select %38, %40, %41 : vector<8x16xi1>, vector<8x16xf32>
    %43 = arith.addf %24, %42 : vector<8x16xf32>
    %c2147483647_i32 = arith.constant 2147483647 : i32
    %44 = vector.broadcast %c2147483647_i32 : i32 to vector<8x16xi32>
    %45 = arith.select %38, %44, %23 : vector<8x16xi1>, vector<8x16xi32>
    %cst_16 = arith.constant dense<2147483647> : vector<16xi32>
    %46 = vector.multi_reduction <minsi>, %45, %cst_16 [0] : vector<8x16xi32> to vector<16xi32>
    %47 = vector.shape_cast %46 : vector<16xi32> to vector<1x16xi32>
    %c-8_i32_17 = arith.constant -8 : i32
    %48 = vector.broadcast %c-8_i32_17 : i32 to vector<1x16xi32>
    %49 = arith.andi %47, %48 : vector<1x16xi32>
    %50 = tpu.bitcast %49 : vector<1x16xi32> -> vector<1x16xf32>
    %51 = math.sqrt %50 : vector<1x16xf32>
    %cst_18 = arith.constant 9.99999993E-9 : f32
    %52 = vector.broadcast %cst_18 : f32 to vector<1x16xf32>
    %53 = arith.addf %51, %52 : vector<1x16xf32>
    %cst_19 = arith.constant 1.000000e+00 : f32
    %54 = vector.broadcast %cst_19 : f32 to vector<1x16xf32>
    %55 = arith.divf %54, %53 : vector<1x16xf32>
    %56 = arith.addf %36, %55 : vector<1x16xf32>
    %57 = vector.broadcast %47 : vector<1x16xi32> to vector<8x16xi32>
    %58 = arith.cmpi eq, %45, %57 : vector<8x16xi32>
    %cst_20 = arith.constant 0.000000e+00 : f32
    %59 = vector.shape_cast %55 : vector<1x16xf32> to vector<1x16xf32>
    %60 = vector.broadcast %59 : vector<1x16xf32> to vector<8x16xf32>
    %61 = vector.broadcast %cst_20 : f32 to vector<8x16xf32>
    %62 = arith.select %58, %60, %61 : vector<8x16xi1>, vector<8x16xf32>
    %63 = arith.addf %43, %62 : vector<8x16xf32>
    %c2147483647_i32_21 = arith.constant 2147483647 : i32
    %64 = vector.broadcast %c2147483647_i32_21 : i32 to vector<8x16xi32>
    %65 = arith.select %58, %64, %45 : vector<8x16xi1>, vector<8x16xi32>
    %cst_22 = arith.constant dense<2147483647> : vector<16xi32>
    %66 = vector.multi_reduction <minsi>, %65, %cst_22 [0] : vector<8x16xi32> to vector<16xi32>
    %67 = vector.shape_cast %66 : vector<16xi32> to vector<1x16xi32>
    %c-8_i32_23 = arith.constant -8 : i32
    %68 = vector.broadcast %c-8_i32_23 : i32 to vector<1x16xi32>
    %69 = arith.andi %67, %68 : vector<1x16xi32>
    %70 = tpu.bitcast %69 : vector<1x16xi32> -> vector<1x16xf32>
    %71 = math.sqrt %70 : vector<1x16xf32>
    %cst_24 = arith.constant 9.99999993E-9 : f32
    %72 = vector.broadcast %cst_24 : f32 to vector<1x16xf32>
    %73 = arith.addf %71, %72 : vector<1x16xf32>
    %cst_25 = arith.constant 1.000000e+00 : f32
    %74 = vector.broadcast %cst_25 : f32 to vector<1x16xf32>
    %75 = arith.divf %74, %73 : vector<1x16xf32>
    %76 = arith.addf %56, %75 : vector<1x16xf32>
    %77 = vector.broadcast %67 : vector<1x16xi32> to vector<8x16xi32>
    %78 = arith.cmpi eq, %65, %77 : vector<8x16xi32>
    %cst_26 = arith.constant 0.000000e+00 : f32
    %79 = vector.shape_cast %75 : vector<1x16xf32> to vector<1x16xf32>
    %80 = vector.broadcast %79 : vector<1x16xf32> to vector<8x16xf32>
    %81 = vector.broadcast %cst_26 : f32 to vector<8x16xf32>
    %82 = arith.select %78, %80, %81 : vector<8x16xi1>, vector<8x16xf32>
    %83 = arith.addf %63, %82 : vector<8x16xf32>
    %84 = tpu.reciprocal %76 {approx = true} : vector<1x16xf32> -> vector<1x16xf32>
    %c0_27 = arith.constant 0 : index
    %c0_28 = arith.constant 0 : index
    %c0_29 = arith.constant 0 : index
    %85 = vector.load %arg5[%c0_27, %c0_28, %c0_29] : memref<1x6x8xf32, #tpu.memory_space<vmem>>, vector<1x6x8xf32>
    %86 = vector.shape_cast %85 : vector<1x6x8xf32> to vector<6x8xf32>
    %87 = arith.truncf %86 : vector<6x8xf32> to vector<6x8xbf16>
    %88 = arith.truncf %83 : vector<8x16xf32> to vector<8x16xbf16>
    %cst_30 = arith.constant dense<0.000000e+00> : vector<6x16xf32>
    %89 = tpu.matmul %87, %88, %cst_30 {dimension_numbers = #tpu.dot_dimension_numbers<[1], [0], [0], [1], [0, 0, 1, 1], [], []>} : vector<6x8xbf16>, vector<8x16xbf16>, vector<6x16xf32> -> vector<6x16xf32>
    %90 = vector.broadcast %84 : vector<1x16xf32> to vector<6x16xf32>
    %91 = arith.mulf %89, %90 : vector<6x16xf32>
    %c0_31 = arith.constant 0 : index
    %c0_32 = arith.constant 0 : index
    %c0_33 = arith.constant 0 : index
    %92 = vector.load %arg4[%c0_31, %c0_32, %c0_33] : memref<1x4x16xf32, #tpu.memory_space<vmem>>, vector<1x4x16xf32>
    %93 = vector.shape_cast %92 : vector<1x4x16xf32> to vector<4x16xf32>
    %94 = tpu.concatenate %91, %93 in 0 : vector<6x16xf32>, vector<4x16xf32> -> vector<10x16xf32>
    %c0_34 = arith.constant 0 : index
    %c0_35 = arith.constant 0 : index
    %95 = vector.load %arg6[%c0_34, %c0_35] : memref<32x10xbf16, #tpu.memory_space<vmem>>, vector<32x10xbf16>
    %c0_36 = arith.constant 0 : index
    %c0_37 = arith.constant 0 : index
    %96 = vector.load %arg7[%c0_36, %c0_37] : memref<32x1xf32, #tpu.memory_space<vmem>>, vector<32x1xf32>
    %97 = arith.truncf %94 : vector<10x16xf32> to vector<10x16xbf16>
    %cst_38 = arith.constant dense<0.000000e+00> : vector<32x16xf32>
    %98 = tpu.matmul %95, %97, %cst_38 {dimension_numbers = #tpu.dot_dimension_numbers<[1], [0], [0], [1], [0, 0, 1, 1], [], []>} : vector<32x10xbf16>, vector<10x16xbf16>, vector<32x16xf32> -> vector<32x16xf32>
    %99 = vector.broadcast %96 : vector<32x1xf32> to vector<32x16xf32>
    %100 = arith.addf %98, %99 : vector<32x16xf32>
    %cst_39 = arith.constant 0.000000e+00 : f32
    %101 = vector.broadcast %cst_39 : f32 to vector<32x16xf32>
    %102 = arith.maximumf %100, %101 : vector<32x16xf32>
    %c0_40 = arith.constant 0 : index
    %c0_41 = arith.constant 0 : index
    %103 = vector.load %arg8[%c0_40, %c0_41] : memref<16x32xbf16, #tpu.memory_space<vmem>>, vector<16x32xbf16>
    %c0_42 = arith.constant 0 : index
    %c0_43 = arith.constant 0 : index
    %104 = vector.load %arg9[%c0_42, %c0_43] : memref<16x1xf32, #tpu.memory_space<vmem>>, vector<16x1xf32>
    %105 = arith.truncf %102 : vector<32x16xf32> to vector<32x16xbf16>
    %cst_44 = arith.constant dense<0.000000e+00> : vector<16x16xf32>
    %106 = tpu.matmul %103, %105, %cst_44 {dimension_numbers = #tpu.dot_dimension_numbers<[1], [0], [0], [1], [0, 0, 1, 1], [], []>} : vector<16x32xbf16>, vector<32x16xbf16>, vector<16x16xf32> -> vector<16x16xf32>
    %107 = vector.broadcast %104 : vector<16x1xf32> to vector<16x16xf32>
    %108 = arith.addf %106, %107 : vector<16x16xf32>
    %cst_45 = arith.constant 0.000000e+00 : f32
    %109 = vector.broadcast %cst_45 : f32 to vector<16x16xf32>
    %110 = arith.maximumf %108, %109 : vector<16x16xf32>
    %c0_46 = arith.constant 0 : index
    %c0_47 = arith.constant 0 : index
    %c0_48 = arith.constant 0 : index
    %111 = vector.load %arg10[%c0_46, %c0_47, %c0_48] : memref<1x16x16xf32, #tpu.memory_space<vmem>>, vector<1x16x16xf32>
    %112 = vector.shape_cast %111 : vector<1x16x16xf32> to vector<16x16xf32>
    %113 = vector.shape_cast %110 : vector<16x16xf32> to vector<1x16x16xf32>
    tpu.vector_store %arg10[%c0_46, %c0_47, %c0_48], %113 {strides = array<i32>} : memref<1x16x16xf32, #tpu.memory_space<vmem>>, vector<1x16x16xf32>,
    return
  }
  func.func @transform_0(%arg0: i32, %arg1: i32) -> (i32, i32, i32) {
    %c0_i32 = arith.constant 0 : i32
    %c0_i32_0 = arith.constant 0 : i32
    return %arg0, %c0_i32, %arg1 : i32, i32, i32
  }
  func.func @transform_1(%arg0: i32, %arg1: i32) -> (i32, i32, i32) {
    %c0_i32 = arith.constant 0 : i32
    %c0_i32_0 = arith.constant 0 : i32
    %c0_i32_1 = arith.constant 0 : i32
    return %arg0, %c0_i32, %c0_i32_0 : i32, i32, i32
  }
  func.func @transform_2(%arg0: i32, %arg1: i32) -> (i32, i32, i32) {
    %c0_i32 = arith.constant 0 : i32
    %c0_i32_0 = arith.constant 0 : i32
    return %arg0, %c0_i32, %arg1 : i32, i32, i32
  }
  func.func @transform_3(%arg0: i32, %arg1: i32) -> (i32, i32, i32) {
    %c0_i32 = arith.constant 0 : i32
    %c0_i32_0 = arith.constant 0 : i32
    %c0_i32_1 = arith.constant 0 : i32
    return %arg0, %c0_i32, %c0_i32_0 : i32, i32, i32
  }
  func.func @transform_4(%arg0: i32, %arg1: i32) -> (i32, i32) {
    %c0_i32 = arith.constant 0 : i32
    %c0_i32_0 = arith.constant 0 : i32
    %c0_i32_1 = arith.constant 0 : i32
    return %c0_i32, %c0_i32_0 : i32, i32
  }
  func.func @transform_5(%arg0: i32, %arg1: i32) -> (i32, i32) {
    %c0_i32 = arith.constant 0 : i32
    %c0_i32_0 = arith.constant 0 : i32
    %c0_i32_1 = arith.constant 0 : i32
    return %c0_i32, %c0_i32_0 : i32, i32
  }
  func.func @transform_6(%arg0: i32, %arg1: i32) -> (i32, i32) {
    %c0_i32 = arith.constant 0 : i32
    %c0_i32_0 = arith.constant 0 : i32
    %c0_i32_1 = arith.constant 0 : i32
    return %c0_i32, %c0_i32_0 : i32, i32
  }
  func.func @transform_7(%arg0: i32, %arg1: i32) -> (i32, i32) {
    %c0_i32 = arith.constant 0 : i32
    %c0_i32_0 = arith.constant 0 : i32
    %c0_i32_1 = arith.constant 0 : i32
    return %c0_i32, %c0_i32_0 : i32, i32
  }
  func.func @transform_8(%arg0: i32, %arg1: i32) -> (i32, i32, i32) {
    %c0_i32 = arith.constant 0 : i32
    %c0_i32_0 = arith.constant 0 : i32
    return %arg0, %c0_i32, %arg1 : i32, i32, i32
  }
}

</mosaic_0001>

<llo_original>
// kernel: tpu_custom_call.1
$region0: #{tpu_custom_call.1}
  #allocation0 [shape = 'u32[]', space=smem, size = 0x4, offset = 0x4, fixed_abs, tag = 'smem constant byte address 0x4 - core index']
  #allocation1 [shape = 'u32[72,128]{1,0:T(1,128)}', space=vmem, size = 0x9000, scoped, tag = 'internal scratch']
  %s0 = inlined_call_operand.vmem [shape: f32[2,3,16], index: 0, kind: input, shape index: {}]
  %s1 = inlined_call_operand.vmem [shape: f32[2,8,3], index: 1, kind: input, shape index: {}]
  %s2 = inlined_call_operand.vmem [shape: f32[2,4,16], index: 2, kind: input, shape index: {}]
  %s3 = inlined_call_operand.vmem [shape: f32[2,6,8], index: 3, kind: input, shape index: {}]
  %s4 = inlined_call_operand.vmem [shape: bf16[32,10], index: 4, kind: input, shape index: {}]
  %s5 = inlined_call_operand.vmem [shape: f32[32,1], index: 5, kind: input, shape index: {}]
  %s6 = inlined_call_operand.vmem [shape: bf16[16,32], index: 6, kind: input, shape index: {}]
  %s7 = inlined_call_operand.vmem [shape: f32[16,1], index: 7, kind: input, shape index: {}]
  %s8 = inlined_call_operand.hbm [shape: f32[2,16,16], index: 8, kind: output, shape index: {}]
  %s9 = sld [smem:[#allocation0]]
  $region65: #{tpu_custom_call.1} parent=0
    _
  %s11 = ssub.s32 1, %s9
  %s12 = scalar_select 0, %s11, %s9
  $region1: #{tpu_custom_call.1} parent=0
    #allocation2 [shape = 'u8[16384]{0}', space=vmem, size = 0x4000, scoped, tag = 'output window, operand 0']
    #allocation3 [shape = 's32[2]{0}', space=sflag, size = 0x8, scoped, tag = 'scoped memory for tpu_custom_call.1']
    %13 = vsyncpa [#allocation3], 0
    %s14 = scalar_lea.sflag [#allocation3], 1
    %15 = vsyncpa %s14, 0
    loop: start=0, step=1, limit=4
    $region2: #{tpu_custom_call.1} parent=1 // loop_pre_header
      _
    $region3: #{tpu_custom_call.1} parent=1 // loop_header
      %s17 = sphi 0, %s21
      %p18 = scmp.ge.s32.totalorder %s17, 4
      %s24 = sphi 0, %s36
      %s25 = sphi 0, %s32
      %s26 = sphi 0, %s24
      %s27 = sphi 0, %s25
      %s28 = sphi 0, %s26
      %s29 = sphi 0, %s27
      %s41 = sphi 0, %s43
      %s44 = sphi 0, %s41
      %s45 = sphi 0, %s44
      %s61 = sphi 0, %s45
      %s67 = sphi 0, %s69
      %s70 = sphi 0, %s67
      %s71 = sphi 0, %s70
      %s87 = sphi 0, %s71
      %s95 = sphi 0, %s97
      %s98 = sphi 0, %s95
      %s99 = sphi 0, %s98
      %s115 = sphi 0, %s99
      %s121 = sphi 0, %s123
      %s124 = sphi 0, %s121
      %s125 = sphi 0, %s124
      %s141 = sphi 0, %s125
      %s145 = sphi 0, %s145
      %s147 = sphi 0, %s145
      %s148 = sphi 0, %s147
      %s162 = sphi 0, %s148
      %s166 = sphi 0, %s166
      %s168 = sphi 0, %s166
      %s169 = sphi 0, %s168
      %s183 = sphi 0, %s169
      %s187 = sphi 0, %s187
      %s189 = sphi 0, %s187
      %s190 = sphi 0, %s189
      %s204 = sphi 0, %s190
      %s208 = sphi 0, %s208
      %s210 = sphi 0, %s208
      %s211 = sphi 0, %s210
      %s225 = sphi 0, %s211
      %s233 = sphi 0, %s235
      %s236 = sphi 0, %s233
      %s237 = sphi 0, %s236
      %s253 = sphi 0, %s237
    $region4: #{tpu_custom_call.1} parent=1 // loop_header_branch
      %20 = sbr.rel (%p18) target = $region8
    $region5: #{tpu_custom_call.1} parent=1 // loop_body
      %s22 = ssub.s32 %s17, 1
      %s23 = ssub.s32 %s17, 2
      %s30 = sadd.s32 1, %s25
      %p31 = scmp.ge.s32.totalorder %s30, 1
      %s32 = scalar_select %p31, 0, %s30
      %s33 = sadd.s32 1, %s24
      %s34 = scalar_select %p31, %s33, %s24
      %p35 = scmp.ge.s32.totalorder %s34, 2
      %s36 = scalar_select %p35, 0, %s34
      %s37 = ssub.s32 %s24, %s36
      %s38 = ssub.s32 %s25, %s32
      %s39 = sor.u32 %s37, %s38
      %p40 = scmp.eq.s32.totalorder %s39, 0
      %s42 = sadd.s32 %s41, 1
      %s43 = scalar_select %p40, %s41, %s42
      %p46 = pneg %p40
      %p47 = scmp.eq.s32.totalorder %s17, 1
      %p48 = por %p46, %p47
      %p49 = scmp.ne.s32.totalorder %s41, %s44
      %p50 = scmp.eq.s32.totalorder %s17, 0
      %p51 = por %p49, %p50
      %p52 = scmp.ne.s32.totalorder %s41, %s44
      %p53 = scmp.eq.s32.totalorder %s22, 1
      %p54 = por %p52, %p53
      %p55 = scmp.ne.s32.totalorder %s44, %s45
      %p56 = scmp.eq.s32.totalorder %s22, 0
      %p57 = por %p55, %p56
      %p58 = scmp.ne.s32.totalorder %s44, %s45
      %p59 = scmp.eq.s32.totalorder %s23, 1
      %p60 = por %p58, %p59
      %p62 = scmp.ne.s32.totalorder %s45, %s61
      %p63 = scmp.eq.s32.totalorder %s23, 0
      %p64 = por %p62, %p63
      %s65 = ssub.s32 %s24, %s36
      %p66 = scmp.eq.s32.totalorder %s65, 0
      %s68 = sadd.s32 %s67, 1
      %s69 = scalar_select %p66, %s67, %s68
      %p72 = pneg %p66
      %p73 = scmp.eq.s32.totalorder %s17, 1
      %p74 = por %p72, %p73
      %p75 = scmp.ne.s32.totalorder %s67, %s70
      %p76 = scmp.eq.s32.totalorder %s17, 0
      %p77 = por %p75, %p76
      %p78 = scmp.ne.s32.totalorder %s67, %s70
      %p79 = scmp.eq.s32.totalorder %s22, 1
      %p80 = por %p78, %p79
      %p81 = scmp.ne.s32.totalorder %s70, %s71
      %p82 = scmp.eq.s32.totalorder %s22, 0
      %p83 = por %p81, %p82
      %p84 = scmp.ne.s32.totalorder %s70, %s71
      %p85 = scmp.eq.s32.totalorder %s23, 1
      %p86 = por %p84, %p85
      %p88 = scmp.ne.s32.totalorder %s71, %s87
      %p89 = scmp.eq.s32.totalorder %s23, 0
      %p90 = por %p88, %p89
      %s91 = ssub.s32 %s24, %s36
      %s92 = ssub.s32 %s25, %s32
      %s93 = sor.u32 %s91, %s92
      %p94 = scmp.eq.s32.totalorder %s93, 0
      %s96 = sadd.s32 %s95, 1
      %s97 = scalar_select %p94, %s95, %s96
      %p100 = pneg %p94
      %p101 = scmp.eq.s32.totalorder %s17, 1
      %p102 = por %p100, %p101
      %p103 = scmp.ne.s32.totalorder %s95, %s98
      %p104 = scmp.eq.s32.totalorder %s17, 0
      %p105 = por %p103, %p104
      %p106 = scmp.ne.s32.totalorder %s95, %s98
      %p107 = scmp.eq.s32.totalorder %s22, 1
      %p108 = por %p106, %p107
      %p109 = scmp.ne.s32.totalorder %s98, %s99
      %p110 = scmp.eq.s32.totalorder %s22, 0
      %p111 = por %p109, %p110
      %p112 = scmp.ne.s32.totalorder %s98, %s99
      %p113 = scmp.eq.s32.totalorder %s23, 1
      %p114 = por %p112, %p113
      %p116 = scmp.ne.s32.totalorder %s99, %s115
      %p117 = scmp.eq.s32.totalorder %s23, 0
      %p118 = por %p116, %p117
      %s119 = ssub.s32 %s24, %s36
      %p120 = scmp.eq.s32.totalorder %s119, 0
      %s122 = sadd.s32 %s121, 1
      %s123 = scalar_select %p120, %s121, %s122
      %p126 = pneg %p120
      %p127 = scmp.eq.s32.totalorder %s17, 1
      %p128 = por %p126, %p127
      %p129 = scmp.ne.s32.totalorder %s121, %s124
      %p130 = scmp.eq.s32.totalorder %s17, 0
      %p131 = por %p129, %p130
      %p132 = scmp.ne.s32.totalorder %s121, %s124
      %p133 = scmp.eq.s32.totalorder %s22, 1
      %p134 = por %p132, %p133
      %p135 = scmp.ne.s32.totalorder %s124, %s125
      %p136 = scmp.eq.s32.totalorder %s22, 0
      %p137 = por %p135, %p136
      %p138 = scmp.ne.s32.totalorder %s124, %s125
      %p139 = scmp.eq.s32.totalorder %s23, 1
      %p140 = por %p138, %p139
      %p142 = scmp.ne.s32.totalorder %s125, %s141
      %p143 = scmp.eq.s32.totalorder %s23, 0
      %p144 = por %p142, %p143
      %s146 = sadd.s32 %s145, 1
      %p149 = scmp.eq.s32.totalorder %s17, 1
      %p150 = scmp.ne.s32.totalorder %s145, %s147
      %p151 = scmp.eq.s32.totalorder %s17, 0
      %p152 = por %p150, %p151
      %p153 = scmp.ne.s32.totalorder %s145, %s147
      %p154 = scmp.eq.s32.totalorder %s22, 1
      %p155 = por %p153, %p154
      %p156 = scmp.ne.s32.totalorder %s147, %s148
      %p157 = scmp.eq.s32.totalorder %s22, 0
      %p158 = por %p156, %p157
      %p159 = scmp.ne.s32.totalorder %s147, %s148
      %p160 = scmp.eq.s32.totalorder %s23, 1
      %p161 = por %p159, %p160
      %p163 = scmp.ne.s32.totalorder %s148, %s162
      %p164 = scmp.eq.s32.totalorder %s23, 0
      %p165 = por %p163, %p164
      %s167 = sadd.s32 %s166, 1
      %p170 = scmp.eq.s32.totalorder %s17, 1
      %p171 = scmp.ne.s32.totalorder %s166, %s168
      %p172 = scmp.eq.s32.totalorder %s17, 0
      %p173 = por %p171, %p172
      %p174 = scmp.ne.s32.totalorder %s166, %s168
      %p175 = scmp.eq.s32.totalorder %s22, 1
      %p176 = por %p174, %p175
      %p177 = scmp.ne.s32.totalorder %s168, %s169
      %p178 = scmp.eq.s32.totalorder %s22, 0
      %p179 = por %p177, %p178
      %p180 = scmp.ne.s32.totalorder %s168, %s169
      %p181 = scmp.eq.s32.totalorder %s23, 1
      %p182 = por %p180, %p181
      %p184 = scmp.ne.s32.totalorder %s169, %s183
      %p185 = scmp.eq.s32.totalorder %s23, 0
      %p186 = por %p184, %p185
      %s188 = sadd.s32 %s187, 1
      %p191 = scmp.eq.s32.totalorder %s17, 1
      %p192 = scmp.ne.s32.totalorder %s187, %s189
      %p193 = scmp.eq.s32.totalorder %s17, 0
      %p194 = por %p192, %p193
      %p195 = scmp.ne.s32.totalorder %s187, %s189
      %p196 = scmp.eq.s32.totalorder %s22, 1
      %p197 = por %p195, %p196
      %p198 = scmp.ne.s32.totalorder %s189, %s190
      %p199 = scmp.eq.s32.totalorder %s22, 0
      %p200 = por %p198, %p199
      %p201 = scmp.ne.s32.totalorder %s189, %s190
      %p202 = scmp.eq.s32.totalorder %s23, 1
      %p203 = por %p201, %p202
      %p205 = scmp.ne.s32.totalorder %s190, %s204
      %p206 = scmp.eq.s32.totalorder %s23, 0
      %p207 = por %p205, %p206
      %s209 = sadd.s32 %s208, 1
      %p212 = scmp.eq.s32.totalorder %s17, 1
      %p213 = scmp.ne.s32.totalorder %s208, %s210
      %p214 = scmp.eq.s32.totalorder %s17, 0
      %p215 = por %p213, %p214
      %p216 = scmp.ne.s32.totalorder %s208, %s210
      %p217 = scmp.eq.s32.totalorder %s22, 1
      %p218 = por %p216, %p217
      %p219 = scmp.ne.s32.totalorder %s210, %s211
      %p220 = scmp.eq.s32.totalorder %s22, 0
      %p221 = por %p219, %p220
      %p222 = scmp.ne.s32.totalorder %s210, %s211
      %p223 = scmp.eq.s32.totalorder %s23, 1
      %p224 = por %p222, %p223
      %p226 = scmp.ne.s32.totalorder %s211, %s225
      %p227 = scmp.eq.s32.totalorder %s23, 0
      %p228 = por %p226, %p227
      %s229 = ssub.s32 %s24, %s36
      %s230 = ssub.s32 %s25, %s32
      %s231 = sor.u32 %s229, %s230
      %p232 = scmp.eq.s32.totalorder %s231, 0
      %s234 = sadd.s32 %s233, 1
      %s235 = scalar_select %p232, %s233, %s234
      %p238 = pneg %p232
      %p239 = scmp.eq.s32.totalorder %s17, 1
      %p240 = por %p238, %p239
      %p241 = scmp.ne.s32.totalorder %s233, %s236
      %p242 = scmp.eq.s32.totalorder %s17, 0
      %p243 = por %p241, %p242
      %p244 = scmp.ne.s32.totalorder %s233, %s236
      %p245 = scmp.eq.s32.totalorder %s22, 1
      %p246 = por %p244, %p245
      %p247 = scmp.ne.s32.totalorder %s236, %s237
      %p248 = scmp.eq.s32.totalorder %s22, 0
      %p249 = por %p247, %p248
      %p250 = scmp.ne.s32.totalorder %s236, %s237
      %p251 = scmp.eq.s32.totalorder %s23, 1
      %p252 = por %p250, %p251
      %p254 = scmp.ne.s32.totalorder %s237, %s253
      %p255 = scmp.eq.s32.totalorder %s23, 0
      %p256 = por %p254, %p255
      %p257 = scmp.le.s32.totalorder 1, %s17
      %p258 = scmp.lt.s32.totalorder %s17, 3
      %p259 = pnand %p257, %p258
      %p260 = pneg %p259
      // Predicated region
      $region9: #{tpu_custom_call.1} parent=5 // pred_check
        _
      $region10: #{tpu_custom_call.1} parent=5 // pred_check_branch
        %262 = sbr.rel (%p259) target = $region12
      $region11: #{tpu_custom_call.1} parent=5 // pred_region
        %s263 = ssub.s32 %s17, 1
        // Predicated region
        $region13: #{tpu_custom_call.1} parent=11 // pred_check
          %p264 = pneg %p158
        $region14: #{tpu_custom_call.1} parent=11 // pred_check_branch
          %266 = sbr.rel (%p264) target = $region16
        $region15: #{tpu_custom_call.1} parent=11 // pred_region
          _
        $region16: #{tpu_custom_call.1} parent=11 // pred_fallthru
          _
        // Predicated region
        $region17: #{tpu_custom_call.1} parent=11 // pred_check
          %p267 = pneg %p179
        $region18: #{tpu_custom_call.1} parent=11 // pred_check_branch
          %269 = sbr.rel (%p267) target = $region20
        $region19: #{tpu_custom_call.1} parent=11 // pred_region
          _
        $region20: #{tpu_custom_call.1} parent=11 // pred_fallthru
          _
        // Predicated region
        $region21: #{tpu_custom_call.1} parent=11 // pred_check
          %p270 = pneg %p200
        $region22: #{tpu_custom_call.1} parent=11 // pred_check_branch
          %272 = sbr.rel (%p270) target = $region24
        $region23: #{tpu_custom_call.1} parent=11 // pred_region
          _
        $region24: #{tpu_custom_call.1} parent=11 // pred_fallthru
          _
        // Predicated region
        $region25: #{tpu_custom_call.1} parent=11 // pred_check
          %p273 = pneg %p221
        $region26: #{tpu_custom_call.1} parent=11 // pred_check_branch
          %275 = sbr.rel (%p273) target = $region28
        $region27: #{tpu_custom_call.1} parent=11 // pred_region
          _
        $region28: #{tpu_custom_call.1} parent=11 // pred_fallthru
          _
      $region12: #{tpu_custom_call.1} parent=5 // pred_fallthru
        _
      %p276 = scmp.lt.s32.totalorder %s17, 2
      // Predicated region
      $region29: #{tpu_custom_call.1} parent=5 // pred_check
        %p277 = pneg %p276
      $region30: #{tpu_custom_call.1} parent=5 // pred_check_branch
        %279 = sbr.rel (%p277) target = $region32
      $region31: #{tpu_custom_call.1} parent=5 // pred_region
        // Predicated region
        $region33: #{tpu_custom_call.1} parent=31 // pred_check
          %p280 = pneg %p51
        $region34: #{tpu_custom_call.1} parent=31 // pred_check_branch
          %282 = sbr.rel (%p280) target = $region36
        $region35: #{tpu_custom_call.1} parent=31 // pred_region
          %p283 = scmp.lt.s32.totalorder %s24, 1
          %s284 = scalar_select %p283, %s24, 1
          %p285 = scmp.lt.s32.totalorder %s25, 0
          %s286 = scalar_select %p285, %s25, 0
          %s287 = sadd.s32 %s286, %s284
          %s288 = smul.addr %s287, 4
          %s289 = scalar_lea.vmem %s0, %s288
        $region36: #{tpu_custom_call.1} parent=31 // pred_fallthru
          _
        // Predicated region
        $region37: #{tpu_custom_call.1} parent=31 // pred_check
          %p290 = pneg %p77
        $region38: #{tpu_custom_call.1} parent=31 // pred_check_branch
          %292 = sbr.rel (%p290) target = $region40
        $region39: #{tpu_custom_call.1} parent=31 // pred_region
          %p293 = scmp.lt.s32.totalorder %s24, 1
          %s294 = scalar_select %p293, %s24, 1
          %s295 = smul.addr %s294, 8
          %s296 = scalar_lea.vmem %s1, %s295
        $region40: #{tpu_custom_call.1} parent=31 // pred_fallthru
          _
        // Predicated region
        $region41: #{tpu_custom_call.1} parent=31 // pred_check
          %p297 = pneg %p105
        $region42: #{tpu_custom_call.1} parent=31 // pred_check_branch
          %299 = sbr.rel (%p297) target = $region44
        $region43: #{tpu_custom_call.1} parent=31 // pred_region
          %p300 = scmp.lt.s32.totalorder %s24, 1
          %s301 = scalar_select %p300, %s24, 1
          %p302 = scmp.lt.s32.totalorder %s25, 0
          %s303 = scalar_select %p302, %s25, 0
          %s304 = sadd.s32 %s303, %s301
          %s305 = smul.addr %s304, 4
          %s306 = scalar_lea.vmem %s2, %s305
        $region44: #{tpu_custom_call.1} parent=31 // pred_fallthru
          _
        // Predicated region
        $region45: #{tpu_custom_call.1} parent=31 // pred_check
          %p307 = pneg %p131
        $region46: #{tpu_custom_call.1} parent=31 // pred_check_branch
          %309 = sbr.rel (%p307) target = $region48
        $region47: #{tpu_custom_call.1} parent=31 // pred_region
          %p310 = scmp.lt.s32.totalorder %s24, 1
          %s311 = scalar_select %p310, %s24, 1
          %s312 = smul.addr %s311, 8
          %s313 = scalar_lea.vmem %s3, %s312
        $region48: #{tpu_custom_call.1} parent=31 // pred_fallthru
          _
      $region32: #{tpu_custom_call.1} parent=5 // pred_fallthru
        _
      %p314 = scmp.le.s32.totalorder 1, %s17
      %p315 = scmp.lt.s32.totalorder %s17, 3
      %p316 = pnand %p314, %p315
      %p317 = pneg %p316
      // Predicated region
      $region49: #{tpu_custom_call.1} parent=5 // pred_check
        _
      $region50: #{tpu_custom_call.1} parent=5 // pred_check_branch
        %319 = sbr.rel (%p316) target = $region52
      $region51: #{tpu_custom_call.1} parent=5 // pred_region
        %s320 = ssub.s32 %s17, 1
        %p321 = scmp.lt.s32.totalorder %s26, 1
        %s322 = scalar_select %p321, %s26, 1
        %p323 = scmp.lt.s32.totalorder %s27, 0
        %s324 = scalar_select %p323, %s27, 0
        %s325 = sadd.s32 %s324, %s322
        %s326 = smul.addr %s325, 4
        %s327 = scalar_lea.vmem %s0, %s326
        %p328 = pneg %p57
        %p329 = pneg %p54
        %p330 = scmp.lt.s32.totalorder %s26, 1
        %s331 = scalar_select %p330, %s26, 1
        %s332 = smul.addr %s331, 8
        %s333 = scalar_lea.vmem %s1, %s332
        %p334 = pneg %p83
        %p335 = pneg %p80
        %p336 = scmp.lt.s32.totalorder %s26, 1
        %s337 = scalar_select %p336, %s26, 1
        %p338 = scmp.lt.s32.totalorder %s27, 0
        %s339 = scalar_select %p338, %s27, 0
        %s340 = sadd.s32 %s339, %s337
        %s341 = smul.addr %s340, 4
        %s342 = scalar_lea.vmem %s2, %s341
        %p343 = pneg %p111
        %p344 = pneg %p108
        %p345 = scmp.lt.s32.totalorder %s26, 1
        %s346 = scalar_select %p345, %s26, 1
        %s347 = smul.addr %s346, 8
        %s348 = scalar_lea.vmem %s3, %s347
        %p349 = pneg %p137
        %p350 = pneg %p134
        %p351 = pneg %p158
        %p352 = pneg %p155
        %p353 = pneg %p179
        %p354 = pneg %p176
        %p355 = pneg %p200
        %p356 = pneg %p197
        %p357 = pneg %p221
        %p358 = pneg %p218
        %p359 = pneg %p249
        %p360 = pneg %p246
        %s361 = sand.u32 %s236, 1
        %s362 = scalar_lea.sflag [#allocation3], %s361
        %s363 = sand.u32 %s236, 1
        %s364 = smul.addr %s363, 16
        %s365 = scalar_lea.vmem [#allocation2], %s364
        %p366 = scmp.lt.s32.totalorder %s26, 1
        %s367 = scalar_select %p366, %s26, 1
        %p368 = scmp.lt.s32.totalorder %s27, 0
        %s369 = scalar_select %p368, %s27, 0
        %s370 = sadd.s32 %s369, %s367
        %s371 = smul.addr %s370, 4
        %s372 = scalar_lea.vmem %s0, %s371
        %p373 = scmp.lt.s32.totalorder %s26, 1
        %s374 = scalar_select %p373, %s26, 1
        %s375 = smul.addr %s374, 8
        %s376 = scalar_lea.vmem %s1, %s375
        %p377 = scmp.lt.s32.totalorder %s26, 1
        %s378 = scalar_select %p377, %s26, 1
        %p379 = scmp.lt.s32.totalorder %s27, 0
        %s380 = scalar_select %p379, %s27, 0
        %s381 = sadd.s32 %s380, %s378
        %s382 = smul.addr %s381, 4
        %s383 = scalar_lea.vmem %s2, %s382
        %p384 = scmp.lt.s32.totalorder %s26, 1
        %s385 = scalar_select %p384, %s26, 1
        %s386 = smul.addr %s385, 8
        %s387 = scalar_lea.vmem %s3, %s386
        %v389 = vld [vmem:[%s372] sm:$0x7]
        %v390 = vld [vmem:[%s376] sm:$0xff]
        %vm391 = vcmask 23552
        %v393 = vsel %vm391, %v390, 0
        %vm395 = vcmask 1042432
        %v397 = vsel %vm395, %v389, 0
        %399 = vmatpush.msra.mxu0 0.0
        %400 = vmatpush.msra.mxu0 0.0
        %401 = vmatpush.msra.mxu0 0.0
        %402 = vmatpush.msra.mxu0 0.0
        %403 = vmatpush.msra.mxu0 0.0
        %404 = vmatpush.msra.mxu0 0.0
        %405 = vmatpush.msra.mxu0 0.0
        %406 = vmatpush.msra.mxu0 0.0
        %407 = vmatpush.msra.mxu0 0.0
        %408 = vmatpush.msra.mxu0 0.0
        %409 = vmatpush.msra.mxu0 0.0
        %410 = vmatpush.msra.mxu0 0.0
        %411 = vmatpush.msra.mxu0 0.0
        %412 = vmatpush.msra.mxu0 0.0
        %413 = vmatpush.msra.mxu0 0.0
        %414 = vmatpush.msra.mxu0 %v397
        %415 = vmatmul.f32.gmra.mxu0 %v393
        %v416 = vpop.f32.mrf.mxu0
        %v417 = vadd.f32 0.0, %v416
        %418 = vdwg.mxu0
        %v419 = vmul.f32 %v390, %v390
        %v420 = vsel %vm391, %v419, 0.0
        %421 = vadd.xlane.f32.xlu0 %v420
        %v422 = vpop.xlane.xlu0 %421
        %v423 = vmul.f32 %v389, %v389
        %vm424 = vcmask 124928
        %v425 = vsel %vm424, %v423, 0.0
        %v426 = vrot.slane %v425, 4
        %v427 = vadd.f32 %v425, %v426
        %v428 = vrot.slane %v427, 2
        %v429 = vadd.f32 %v427, %v428
        %v430 = vrot.slane %v429, 1
        %v431 = vadd.f32 %v429, %v430
        %v432 = vadd.f32 %v422, %v431
        %v433 = vmul.f32 %v417, 2.0
        %v434 = vsub.f32 %v432, %v433
        %v435 = vmax.f32 %v434, 0.0
        %v436 = vlaneseq
        %v437 = vshrl.u32 %v436, 7
        %v439 = vand.u32 %v435, 4294967288
        %v440 = vor.u32 %v439, %v437
        %vm441 = vcmask 130048
        %v442 = vsel %vm441, %v440, 2147483647
        %v443 = vrot.slane %v442, 4
        %vm444 = vcmp.lt.s32.totalorder %v442, %v443
        %v445 = vsel %vm444, %v442, %v443
        %v446 = vrot.slane %v445, 2
        %vm447 = vcmp.lt.s32.totalorder %v445, %v446
        %v448 = vsel %vm447, %v445, %v446
        %v449 = vrot.slane %v448, 1
        %vm450 = vcmp.lt.s32.totalorder %v448, %v449
        %v451 = vsel %vm450, %v448, %v449
        %v452 = vand.u32 %v451, 4294967288
        %v454 = vrsqrt.pop %v452
        %v455 = vmul.f32 %v454, %v452
        %v456 = vmul.f32 %v455, %v454
        %v457 = vmul.f32 0.5, %v456
        %v458 = vsub.f32 1.5, %v457
        %v459 = vmul.f32 %v454, %v458
        %v460 = vmul.f32 %v452, %v459
        %vm461 = vcmp.eq.f32.partialorder %v452, inf
        %v462 = vsel %vm461, %v452, %v460
        %vm463 = vcmp.eq.f32.partialorder %v452, 0.0
        %v464 = vand.u32 %v452, 2147483648
        %v465 = vsel %vm463, %v464, %v462
        %v466 = vadd.f32 %v465, 1e-08
        %v467 = vrcp.pop %v466
        %v468 = vmul.f32 %v466, %v467
        %v469 = vsub.f32 1.0, %v468
        %v470 = vmul.f32 %v467, %v469
        %v471 = vadd.f32 %v467, %v470
        %vm472 = vweird.f32 %v466
        %vm473 = vweird.f32 %v467
        %vm474 = vmor %vm472, %vm473
        %v475 = vsel %vm474, %v467, %v471
        %v476 = vand.u32 2147483647, %v466
        %vm477 = vcmp.eq.f32.partialorder %v476, 8.507059e+37
        %v478 = vand.u32 %v466, 2147483648
        %v479 = vor.u32 1.1754944e-38, %v478
        %v480 = vsel %vm477, %v479, %v475
        %v481 = vmul.f32 1.0, %v480
        %v482 = vadd.f32 %v481, 0.0
        %vm483 = vcmp.eq.s32.totalorder %v440, %v451
        %v484 = vsel %vm483, %v481, 0.0
        %v485 = vadd.f32 %v484, 0.0
        %v486 = vsel %vm483, 2147483647, %v440
        %v487 = vsel %vm441, %v486, 2147483647
        %v488 = vrot.slane %v487, 4
        %vm489 = vcmp.lt.s32.totalorder %v487, %v488
        %v490 = vsel %vm489, %v487, %v488
        %v491 = vrot.slane %v490, 2
        %vm492 = vcmp.lt.s32.totalorder %v490, %v491
        %v493 = vsel %vm492, %v490, %v491
        %v494 = vrot.slane %v493, 1
        %vm495 = vcmp.lt.s32.totalorder %v493, %v494
        %v496 = vsel %vm495, %v493, %v494
        %v497 = vand.u32 %v496, 4294967288
        %v499 = vrsqrt.pop %v497
        %v500 = vmul.f32 %v499, %v497
        %v501 = vmul.f32 %v500, %v499
        %v502 = vmul.f32 0.5, %v501
        %v503 = vsub.f32 1.5, %v502
        %v504 = vmul.f32 %v499, %v503
        %v505 = vmul.f32 %v497, %v504
        %vm506 = vcmp.eq.f32.partialorder %v497, inf
        %v507 = vsel %vm506, %v497, %v505
        %vm508 = vcmp.eq.f32.partialorder %v497, 0.0
        %v509 = vand.u32 %v497, 2147483648
        %v510 = vsel %vm508, %v509, %v507
        %v511 = vadd.f32 %v510, 1e-08
        %v512 = vrcp.pop %v511
        %v513 = vmul.f32 %v511, %v512
        %v514 = vsub.f32 1.0, %v513
        %v515 = vmul.f32 %v512, %v514
        %v516 = vadd.f32 %v512, %v515
        %vm517 = vweird.f32 %v511
        %vm518 = vweird.f32 %v512
        %vm519 = vmor %vm517, %vm518
        %v520 = vsel %vm519, %v512, %v516
        %v521 = vand.u32 2147483647, %v511
        %vm522 = vcmp.eq.f32.partialorder %v521, 8.507059e+37
        %v523 = vand.u32 %v511, 2147483648
        %v524 = vor.u32 1.1754944e-38, %v523
        %v525 = vsel %vm522, %v524, %v520
        %v526 = vmul.f32 1.0, %v525
        %v527 = vadd.f32 %v482, %v526
        %vm528 = vcmp.eq.s32.totalorder %v486, %v496
        %v529 = vsel %vm528, %v526, 0.0
        %v530 = vadd.f32 %v485, %v529
        %v531 = vsel %vm528, 2147483647, %v486
        %v532 = vsel %vm441, %v531, 2147483647
        %v533 = vrot.slane %v532, 4
        %vm534 = vcmp.lt.s32.totalorder %v532, %v533
        %v535 = vsel %vm534, %v532, %v533
        %v536 = vrot.slane %v535, 2
        %vm537 = vcmp.lt.s32.totalorder %v535, %v536
        %v538 = vsel %vm537, %v535, %v536
        %v539 = vrot.slane %v538, 1
        %vm540 = vcmp.lt.s32.totalorder %v538, %v539
        %v541 = vsel %vm540, %v538, %v539
        %v542 = vand.u32 %v541, 4294967288
        %v544 = vrsqrt.pop %v542
        %v545 = vmul.f32 %v544, %v542
        %v546 = vmul.f32 %v545, %v544
        %v547 = vmul.f32 0.5, %v546
        %v548 = vsub.f32 1.5, %v547
        %v549 = vmul.f32 %v544, %v548
        %v550 = vmul.f32 %v542, %v549
        %vm551 = vcmp.eq.f32.partialorder %v542, inf
        %v552 = vsel %vm551, %v542, %v550
        %vm553 = vcmp.eq.f32.partialorder %v542, 0.0
        %v554 = vand.u32 %v542, 2147483648
        %v555 = vsel %vm553, %v554, %v552
        %v556 = vadd.f32 %v555, 1e-08
        %v557 = vrcp.pop %v556
        %v558 = vmul.f32 %v556, %v557
        %v559 = vsub.f32 1.0, %v558
        %v560 = vmul.f32 %v557, %v559
        %v561 = vadd.f32 %v557, %v560
        %vm562 = vweird.f32 %v556
        %vm563 = vweird.f32 %v557
        %vm564 = vmor %vm562, %vm563
        %v565 = vsel %vm564, %v557, %v561
        %v566 = vand.u32 2147483647, %v556
        %vm567 = vcmp.eq.f32.partialorder %v566, 8.507059e+37
        %v568 = vand.u32 %v556, 2147483648
        %v569 = vor.u32 1.1754944e-38, %v568
        %v570 = vsel %vm567, %v569, %v565
        %v571 = vmul.f32 1.0, %v570
        %v572 = vadd.f32 %v527, %v571
        %vm573 = vcmp.eq.s32.totalorder %v531, %v541
        %v574 = vsel %vm573, %v571, 0.0
        %v575 = vadd.f32 %v530, %v574
        %v576 = vrcp.pop %v572
        %v577 = vld [vmem:[%s387] sm:$0x3f]
        %v578 = vpack.c.bf16 %v577, %v577
        %v579 = vpack.c.bf16 %v575, %v575
        %vm580 = vcmask 64512
        %v582 = vsel %vm580, %v578, 0
        %vm584 = vcmask 1043456
        %v586 = vsel %vm584, %v579, 0
        %588 = vmatpush.bf16.msra.mxu0 0
        %589 = vmatpush.bf16.msra.mxu0 0
        %590 = vmatpush.bf16.msra.mxu0 0
        %591 = vmatpush.bf16.msra.mxu0 0
        %592 = vmatpush.bf16.msra.mxu0 0
        %593 = vmatpush.bf16.msra.mxu0 0
        %594 = vmatpush.bf16.msra.mxu0 0
        %595 = vmatpush.bf16.msra.mxu0 %v586
        %596 = vmatmul.bf16.gmra.mxu0 %v582
        %v597 = vpop.f32.mrf.mxu0
        %v598 = vadd.f32 0.0, %v597
        %v599 = vpop.f32.mrf.mxu0
        %600 = vdwg.mxu0
        %v601 = vmul.f32 %v598, %v576
        %v602 = vld [vmem:[%s383] sm:$0xf]
        %v604 = vrot.slane %v602, 2
        %vm606 = vcmask 1045504
        %v607 = vsel %vm606, %v601, %v604
        %v608 = vld [vmem:[%s4] sm:$0xf]
        %v609 = vld [vmem:[%s4 + $0x4] sm:$0xf]
        %v610 = vld [vmem:[%s4 + $0x8] sm:$0xf]
        %v611 = vld [vmem:[%s4 + $0xc] sm:$0xf]
        %v612 = vld [vmem:[%s5] sm:$0xff]
        %v613 = vld [vmem:[%s5 + $0x8] sm:$0xff]
        %v614 = vld [vmem:[%s5 + $0x10] sm:$0xff]
        %v615 = vld [vmem:[%s5 + $0x18] sm:$0xff]
        %v616 = vpack.c.bf16 %v604, %v607
        %618 = vset.pattern.permute.xlu0 0
        %619 = vperm.xlu0 %618, %v612
        %v620 = vpop.permute.xlu0 %619
        %623 = vset.pattern.permute.xlu0 0
        %624 = vperm.xlu0 %623, %v613
        %v625 = vpop.permute.xlu0 %624
        %628 = vset.pattern.permute.xlu0 0
        %629 = vperm.xlu0 %628, %v614
        %v630 = vpop.permute.xlu0 %629
        %633 = vset.pattern.permute.xlu0 0
        %634 = vperm.xlu0 %633, %v615
        %v635 = vpop.permute.xlu0 %634
        %v641 = vunpack.c.l.b16 %v608
        %v642 = vunpack.c.l.b16 %v609
        %v643 = vunpack.c.l.b16 %v610
        %v644 = vunpack.c.l.b16 %v611
        %v645 = vpack.c.b16 %v642, %v641
        %v646 = vpack.c.b16 %v644, %v643
        %vm647 = vcmask 80896
        %v649 = vsel %vm647, %v645, 0
        %v652 = vsel %vm647, %v646, 0
        %vm654 = vcmask 1044480
        %v656 = vsel %vm654, %v616, 0
        %658 = vmatpush.bf16.msra.mxu0 0
        %659 = vmatpush.bf16.msra.mxu0 0
        %660 = vmatpush.bf16.msra.mxu0 0
        %661 = vmatpush.bf16.msra.mxu0 0
        %662 = vmatpush.bf16.msra.mxu0 0
        %663 = vmatpush.bf16.msra.mxu0 0
        %664 = vmatpush.bf16.msra.mxu0 0
        %665 = vmatpush.bf16.msra.mxu0 %v656
        %666 = vmatmul.bf16.gmra.mxu0 %v649
        %v667 = vpop.f32.mrf.mxu0
        %v668 = vadd.f32 %v620, %v667
        %v669 = vpop.f32.mrf.mxu0
        %v670 = vadd.f32 %v625, %v669
        %671 = vmatmul.bf16.gmra.mxu0 %v652
        %v672 = vpop.f32.mrf.mxu0
        %v673 = vadd.f32 %v630, %v672
        %v674 = vpop.f32.mrf.mxu0
        %v675 = vadd.f32 %v635, %v674
        %676 = vdwg.mxu0
        %v677 = vmax.f32 %v668, 0.0
        %v678 = vmax.f32 %v670, 0.0
        %v679 = vmax.f32 %v673, 0.0
        %v680 = vmax.f32 %v675, 0.0
        %v681 = vld [vmem:[%s6] sm:$0xf]
        %v682 = vld [vmem:[%s6 + $0x4] sm:$0xf]
        %v683 = vld [vmem:[%s7] sm:$0xff]
        %v684 = vld [vmem:[%s7 + $0x8] sm:$0xff]
        %v685 = vpack.c.bf16 %v678, %v677
        %v686 = vpack.c.bf16 %v680, %v679
        %688 = vset.pattern.permute.xlu0 0
        %689 = vperm.xlu0 %688, %v683
        %v690 = vpop.permute.xlu0 %689
        %693 = vset.pattern.permute.xlu0 0
        %694 = vperm.xlu0 %693, %v684
        %v695 = vpop.permute.xlu0 %694
        %v699 = vunpack.c.l.b16 %v681
        %v700 = vunpack.c.l.b16 %v682
        %v701 = vpack.c.b16 %v700, %v699
        %vm702 = vcmask 261120
        %v704 = vsel %vm702, %v701, 0
        %706 = vmatpush.bf16.msra.mxu0 0
        %707 = vmatpush.bf16.msra.mxu0 0
        %708 = vmatpush.bf16.msra.mxu0 0
        %709 = vmatpush.bf16.msra.mxu0 0
        %710 = vmatpush.bf16.msra.mxu0 0
        %711 = vmatpush.bf16.msra.mxu0 0
        %712 = vmatpush.bf16.msra.mxu0 %v686
        %713 = vmatpush.bf16.msra.mxu0 %v685
        %714 = vmatmul.bf16.gmra.mxu0 %v704
        %v715 = vpop.f32.mrf.mxu0
        %v716 = vadd.f32 %v690, %v715
        %v717 = vpop.f32.mrf.mxu0
        %v718 = vadd.f32 %v695, %v717
        %719 = vdwg.mxu0
        %v720 = vmax.f32 %v716, 0.0
        %v721 = vmax.f32 %v718, 0.0
        %722 = vst.msk [vmem:[%s365] sm:$0xff] %vm441, %v720
        %723 = vst.msk [vmem:[%s365 + $0x8] sm:$0xff] %vm441, %v721
        %s724 = sand.u32 %s236, 1
        %s725 = scalar_lea.sflag [#allocation3], %s724
        %s726 = sand.u32 %s236, 1
        %s727 = smul.addr %s726, 16
        %s728 = scalar_lea.vmem [#allocation2], %s727
        // Predicated region
        $region53: #{tpu_custom_call.1} parent=51 // pred_check
          %p729 = pneg %p246
        $region54: #{tpu_custom_call.1} parent=51 // pred_check_branch
          %731 = sbr.rel (%p729) target = $region56
        $region55: #{tpu_custom_call.1} parent=51 // pred_region
          %733 = vsyncadd %s725, 0
          %s734 = smul.addr %s26, 2
          %s735 = sadd.s32 %s27, %s734
          %s736 = smul.addr %s735, 8
          %s737 = scalar_lea.hbm %s8, %s736
          %s738 = sshll.u32 %s728, 4
          %s739 = int_to_ptr.vmem [resolvable:$true] %s738
          %s740 = sshll.u32 %s737, 4
          %s741 = int_to_ptr.hbm [resolvable:$true] %s740
          %746 = dma.vmem_to_hbm [thread:$0]  %s739, 256, %s741, %s725, 128, 128, 8
        $region56: #{tpu_custom_call.1} parent=51 // pred_fallthru
          _
      $region52: #{tpu_custom_call.1} parent=5 // pred_fallthru
        _
      %p747 = scmp.le.s32.totalorder 2, %s17
      // Predicated region
      $region57: #{tpu_custom_call.1} parent=5 // pred_check
        %p748 = pneg %p747
      $region58: #{tpu_custom_call.1} parent=5 // pred_check_branch
        %750 = sbr.rel (%p748) target = $region60
      $region59: #{tpu_custom_call.1} parent=5 // pred_region
        %s751 = ssub.s32 %s17, 2
        // Predicated region
        $region61: #{tpu_custom_call.1} parent=59 // pred_check
          %p752 = pneg %p252
        $region62: #{tpu_custom_call.1} parent=59 // pred_check_branch
          %754 = sbr.rel (%p752) target = $region64
        $region63: #{tpu_custom_call.1} parent=59 // pred_region
          %s755 = sand.u32 %s237, 1
          %s756 = scalar_lea.sflag [#allocation3], %s755
          %s757 = sand.u32 %s237, 1
          %s758 = smul.addr %s757, 16
          %s759 = scalar_lea.vmem [#allocation2], %s758
          %761 = dma.done %s756, 256
        $region64: #{tpu_custom_call.1} parent=59 // pred_fallthru
          _
      $region60: #{tpu_custom_call.1} parent=5 // pred_fallthru
        _
    $region6: #{tpu_custom_call.1} parent=1 // loop_footer
      %s21 = sadd.s32 1, %s17
    $region7: #{tpu_custom_call.1} parent=1 // loop_footer_branch
      %16 = sbr.rel target = $region3
    $region8: #{tpu_custom_call.1} parent=1 // loop_exit
      _
    %762 = vsyncpa [#allocation3], 1
    %s763 = scalar_lea.sflag [#allocation3], 1
    %764 = vsyncpa %s763, 1

</llo_original>
